<compile_context>
chip_gen: v7x
topology: tpu7x:2x2x1
jax: 0.10.0
libtpu: 0.0.40
codegen_flags: <defaults>
</compile_context>

<pallas_src>
import math

import jax
import jax.numpy as jnp
from jax.experimental import pallas as pl
from jax.experimental.pallas import tpu as pltpu


def _drop_path_kernel(s_ref, x_ref, o_ref):
    """One grid step == one row tile.

    s_ref : VMEM (tile_rows, 1)  per-row scale = mask / keep_prob (x dtype)
    x_ref : VMEM (tile_rows, L)  input tile
    o_ref : VMEM (tile_rows, L)  output tile
    """
    o_ref[...] = (x_ref[...] * s_ref[...]).astype(o_ref.dtype)


def _plan_layout(n_per_sample, itemsize):
    """Pick a row layout for one sample: (L, pad_cols, rows_per_sample)."""
    if n_per_sample % 128 == 0:
        # Lane-dense, no padding ever needed.
        for L in (512, 256, 128):
            if n_per_sample % L == 0:
                return L, 0, n_per_sample // L
    if n_per_sample * itemsize <= (512 << 10):
        # Small non-aligned sample: one row per sample, masked lane stores,
        # but zero extra HBM passes (no pad, no slice).
        return n_per_sample, 0, 1
    # Large non-aligned sample (rare): pad once to a multiple of 128.
    L = 128
    padded = -(-n_per_sample // L) * L
    return L, padded - n_per_sample, padded // L


def _choose_row_tile(rows, row_bytes, target_tile_bytes):
    """Row-tile size: multiple of 8 (or == rows), targeting ~target_tile_bytes."""
    rows_target = max(1, target_tile_bytes // max(row_bytes, 1))
    if rows <= rows_target:
        # Whole problem fits one tile; split in two for v7x dual-TC if worthwhile.
        if rows >= 16 and rows * row_bytes >= (2 << 20):
            half = -(-rows // 2)
            tile = -(-half // 8) * 8
            return tile if tile < rows else rows
        return rows
    tile = max(8, (rows_target // 8) * 8)
    return min(tile, rows)


def drop_path(x, drop_prob, *, training, key, target_tile_bytes=4 << 20):
    """Pallas implementation of DropPath.forward (any input rank, batch first)."""
    if drop_prob is None or drop_prob == 0.0 or not training:
        return x
    if drop_prob >= 1.0:
        # keep_prob == 0: every sample dropped; avoid 0 * (1/0) = NaN.
        return jnp.zeros_like(x)

    keep_prob = 1.0 - float(drop_prob)
    B = x.shape[0]
    N = math.prod(x.shape[1:])
    itemsize = jnp.dtype(x.dtype).itemsize

    # Per-sample Bernoulli(keep_prob) mask folded with 1/keep_prob (f32 math),
    # then cast to the input dtype for a native (bf16-capable) multiply.
    mask = jnp.floor(keep_prob + jax.random.uniform(key, (B,), dtype=jnp.float32))
    scale = mask * jnp.float32(1.0 / keep_prob)
    if jnp.issubdtype(x.dtype, jnp.floating):
        scale = scale.astype(x.dtype)

    L, pad_cols, rows_per_sample = _plan_layout(N, itemsize)
    x2 = x.reshape(B, N)
    if pad_cols:  # rare path: only for large, non-128-aligned samples
        x2 = jnp.pad(x2, ((0, 0), (0, pad_cols)))
    rows = B * rows_per_sample
    x_rows = x2.reshape(rows, L)
    scale_rows = jnp.broadcast_to(scale[:, None], (B, rows_per_sample)).reshape(rows, 1)

    row_bytes = L * itemsize
    tile_rows = _choose_row_tile(rows, row_bytes, target_tile_bytes)
    tile_bytes = tile_rows * row_bytes
    # in + out double-buffered (4 live tiles) + tiny scale blocks + headroom;
    # capped well under v7x's 64 MiB physical VMEM.
    vmem_limit = int(min(48 << 20, max(16 << 20, 5 * tile_bytes + (1 << 20))))

    grid_spec = pltpu.PrefetchScalarGridSpec(
        num_scalar_prefetch=0,
        grid=(pl.cdiv(rows, tile_rows),),
        in_specs=[
            pl.BlockSpec((tile_rows, 1), lambda r: (r, 0)),   # per-row scale
            pl.BlockSpec((tile_rows, L), lambda r: (r, 0)),   # input tile
        ],
        out_specs=pl.BlockSpec((tile_rows, L), lambda r: (r, 0)),
    )

    out_rows = pl.pallas_call(
        _drop_path_kernel,
        out_shape=jax.ShapeDtypeStruct((rows, L), x.dtype),
        grid_spec=grid_spec,
        compiler_params=pltpu.CompilerParams(
            dimension_semantics=("parallel",),
            vmem_limit_bytes=vmem_limit,
        ),
    )(scale_rows, x_rows)

    out2 = out_rows.reshape(B, rows_per_sample * L)
    if pad_cols:
        out2 = out2[:, :N]
    return out2.reshape(x.shape)


class DropPath:
    """Minimal JAX/Pallas counterpart of the PyTorch DropPath module."""

    def __init__(self, drop_prob=None):
        self.drop_prob = drop_prob
        self.training = True  # mirrors nn.Module default mode

    def __call__(self, x, key):
        return drop_path(x, self.drop_prob, training=self.training, key=key)


if __name__ == "__main__":
    key = jax.random.PRNGKey(0)
    k_x, k_drop, k_x2 = jax.random.split(key, 3)

    # Small NCHW input consistent with a residual-block feature map.
    B, C, H, W = 2, 4, 16, 16
    x = jax.random.normal(k_x, (B, C, H, W), dtype=jnp.float32)

    module = DropPath(drop_prob=0.25)

    # Training mode: stochastic depth active (N = 1024 -> lane-dense, no padding).
    module.training = True
    y_train = jax.block_until_ready(module(x, k_drop))

    keep_prob = 1.0 - 0.25
    mask_ref = jnp.floor(
        keep_prob + jax.random.uniform(k_drop, (B,), dtype=jnp.float32)
    )
    y_ref = x * (mask_ref / keep_prob)[:, None, None, None]
    assert jnp.allclose(y_train, y_ref, atol=1e-6), "training-mode mismatch"

    # Non-128-aligned shape exercises the masked-lane (no-pad) path.
    x_odd = jax.random.normal(k_x2, (B, 3, 7, 7), dtype=jnp.float32)
    y_odd = jax.block_until_ready(module(x_odd, k_drop))
    y_odd_ref = x_odd * (mask_ref / keep_prob)[:, None, None, None]
    assert jnp.allclose(y_odd, y_odd_ref, atol=1e-6), "non-aligned-shape mismatch"

    # drop_prob == 1.0: every sample dropped, no NaNs.
    module_all = DropPath(drop_prob=1.0)
    y_all = jax.block_until_ready(module_all(x, k_drop))
    assert jnp.allclose(y_all, jnp.zeros_like(x)), "drop_prob=1.0 mismatch"

    # Eval mode: identity.
    module.training = False
    y_eval = jax.block_until_ready(module(x, k_drop))
    assert jnp.allclose(y_eval, x), "eval-mode mismatch"

    print("KERNEL_OK")
</pallas_src>

<mosaic_0001>
module attributes {stable_mosaic.version = 11 : i64} {
  func.func @_drop_path_kernel(%arg0: i32, %arg1: memref<4x1xf32, #tpu.memory_space<vmem>>, %arg2: memref<4x512xf32, #tpu.memory_space<vmem>>, %arg3: memref<4x512xf32, #tpu.memory_space<vmem>>) attributes {dimension_semantics = [#tpu.dimension_semantics<parallel>], iteration_bounds = array<i64: 1>, scalar_prefetch = 0 : i64, scratch_operands = 0 : i64, tpu.core_type = #tpu.core_type<tc>, window_params = [{transform_indices = @transform_0, window_bounds = array<i64: 4, 1>}, {transform_indices = @transform_1, window_bounds = array<i64: 4, 512>}, {transform_indices = @transform_2, window_bounds = array<i64: 4, 512>}]} {
    %c0 = arith.constant 0 : index
    %c0_0 = arith.constant 0 : index
    %0 = vector.load %arg2[%c0, %c0_0] : memref<4x512xf32, #tpu.memory_space<vmem>>, vector<4x512xf32>
    %c0_1 = arith.constant 0 : index
    %c0_2 = arith.constant 0 : index
    %1 = vector.load %arg1[%c0_1, %c0_2] : memref<4x1xf32, #tpu.memory_space<vmem>>, vector<4x1xf32>
    %2 = vector.broadcast %1 : vector<4x1xf32> to vector<4x512xf32>
    %3 = arith.mulf %0, %2 : vector<4x512xf32>
    %c0_3 = arith.constant 0 : index
    %c0_4 = arith.constant 0 : index
    %4 = vector.load %arg3[%c0_3, %c0_4] : memref<4x512xf32, #tpu.memory_space<vmem>>, vector<4x512xf32>
    tpu.vector_store %arg3[%c0_3, %c0_4], %3 {strides = array<i32>} : memref<4x512xf32, #tpu.memory_space<vmem>>, vector<4x512xf32>,
    return
  }
  func.func @transform_0(%arg0: i32) -> (i32, i32) {
    %c0_i32 = arith.constant 0 : i32
    %c0_i32_0 = arith.constant 0 : i32
    return %arg0, %c0_i32 : i32, i32
  }
  func.func @transform_1(%arg0: i32) -> (i32, i32) {
    %c0_i32 = arith.constant 0 : i32
    %c0_i32_0 = arith.constant 0 : i32
    return %arg0, %c0_i32 : i32, i32
  }
  func.func @transform_2(%arg0: i32) -> (i32, i32) {
    %c0_i32 = arith.constant 0 : i32
    %c0_i32_0 = arith.constant 0 : i32
    return %arg0, %c0_i32 : i32, i32
  }
}

</mosaic_0001>

<llo_original>
// kernel: tpu_custom_call.1
$region0: #{tpu_custom_call.1}
  #allocation0 [shape = 'u32[]', space=smem, size = 0x4, offset = 0x4, fixed_abs, tag = 'smem constant byte address 0x4 - core index']
  #allocation1 [shape = 'u32[144,128]{1,0:T(1,128)}', space=vmem, size = 0x12000, scoped, tag = 'internal scratch']
  %s0 = inlined_call_operand.vmem [shape: f32[4,1], index: 0, kind: input, shape index: {}]
  %s1 = inlined_call_operand.hbm [shape: f32[4,512], index: 1, kind: input, shape index: {}]
  %s2 = inlined_call_operand.hbm [shape: f32[4,512], index: 2, kind: output, shape index: {}]
  %s3 = sld [smem:[#allocation0]]
  $region22: #{tpu_custom_call.1} parent=0
    _
  %s5 = ssub.s32 1, %s3
  %s6 = scalar_select 0, %s5, %s3
  $region1: #{tpu_custom_call.1} parent=0
    #allocation2 [shape = 'u8[8192]{0}', space=vmem, size = 0x2000, scoped, tag = 'input window, operand 1, single buffered']
    #allocation3 [shape = 's32[1]{0}', space=sflag, size = 0x4, scoped, tag = 'scoped memory for tpu_custom_call.1']
    #allocation4 [shape = 's32[1]{0}', space=sflag, size = 0x4, scoped, tag = 'scoped memory for tpu_custom_call.1']
    #allocation5 [shape = 'u8[8192]{0}', space=vmem, size = 0x2000, scoped, tag = 'output window, operand 0, single buffered']
    %7 = vsyncpa [#allocation3], 0
    %8 = vsyncpa [#allocation4], 0
    // Predicated region
    $region2: #{tpu_custom_call.1} parent=1 // pred_check
      _
    $region3: #{tpu_custom_call.1} parent=1 // pred_check_branch
      %10 = sbr.rel (0) target = $region5
    $region4: #{tpu_custom_call.1} parent=1 // pred_region
      _
    $region5: #{tpu_custom_call.1} parent=1 // pred_fallthru
      _
    // Predicated region
    $region6: #{tpu_custom_call.1} parent=1 // pred_check
      _
    $region7: #{tpu_custom_call.1} parent=1 // pred_check_branch
      %12 = sbr.rel (0) target = $region9
    $region8: #{tpu_custom_call.1} parent=1 // pred_region
      %s14 = ssub.s32 256, 256
      %15 = vsyncadd [#allocation3], %s14
      %s17 = sshll.u32 [#allocation2], 4
      %s18 = int_to_ptr.vmem [resolvable:$true] %s17
      %20 = dma.hbm_to_vmem [thread:$0]  %s1, 256, %s18, [#allocation3]
    $region9: #{tpu_custom_call.1} parent=1 // pred_fallthru
      _
    // Predicated region
    $region10: #{tpu_custom_call.1} parent=1 // pred_check
      _
    $region11: #{tpu_custom_call.1} parent=1 // pred_check_branch
      %22 = sbr.rel (0) target = $region13
    $region12: #{tpu_custom_call.1} parent=1 // pred_region
      %23 = dma.done [#allocation3], 256
    $region13: #{tpu_custom_call.1} parent=1 // pred_fallthru
      _
    %v24 = vld [vmem:[#allocation2] sm:$0xff]
    %v25 = vld [vmem:[#allocation2 + $0x8] sm:$0xff]
    %v26 = vld [vmem:[%s0] sm:$0xf]
    %28 = vset.pattern.permute.xlu0 0
    %29 = vperm.xlu0 %28, %v26
    %v30 = vpop.permute.xlu0 %29
    %v32 = vunpack.c.l.s4 839922192
    %v33 = vunpack.c.0.s8 %v32
    %v34 = vlaneseq
    %v35 = vshrl.u32 %v34, 7
    %v36 = vsub.s32 %v33, %v35
    %v37 = vrot.slane %v30, %v36
    %v39 = vmul.f32 %v24, %v37
    %v40 = vmul.f32 %v25, %v37
    %41 = vst [vmem:[#allocation5] sm:$0xff] %v39
    %42 = vst [vmem:[#allocation5 + $0x8] sm:$0xff] %v40
    // Predicated region
    $region14: #{tpu_custom_call.1} parent=1 // pred_check
      _
    $region15: #{tpu_custom_call.1} parent=1 // pred_check_branch
      %44 = sbr.rel (0) target = $region17
    $region16: #{tpu_custom_call.1} parent=1 // pred_region
      %s46 = ssub.s32 256, 256
      %47 = vsyncadd [#allocation4], %s46
      %s49 = sshll.u32 [#allocation5], 4
      %s50 = int_to_ptr.vmem [resolvable:$true] %s49
      %52 = dma.vmem_to_hbm [thread:$0]  %s50, 256, %s2, [#allocation4]
    $region17: #{tpu_custom_call.1} parent=1 // pred_fallthru
      _
    // Predicated region
    $region18: #{tpu_custom_call.1} parent=1 // pred_check
      _
    $region19: #{tpu_custom_call.1} parent=1 // pred_check_branch
      %54 = sbr.rel (0) target = $region21
    $region20: #{tpu_custom_call.1} parent=1 // pred_region
      %55 = dma.done [#allocation4], 256
    $region21: #{tpu_custom_call.1} parent=1 // pred_fallthru
      _
    %56 = vsyncpa [#allocation3], 1
    %57 = vsyncpa [#allocation4], 1

</llo_original>
